<compile_context>
chip_gen: v6e
topology: v6e:2x2x1
jax: 0.10.0
libtpu: 0.0.40
codegen_flags: <defaults>
</compile_context>

<pallas_src>
import itertools
import math

import jax
import jax.numpy as jnp
from jax import lax
from jax.experimental import pallas as pl
from jax.experimental.pallas import tpu as pltpu

_LANE = 128
_SUBLANE_BF16 = 16      # bf16 packs 2 rows per 32-bit sublane -> row tiles in 16s


def _round_up(x, m):
    return ((x + m - 1) // m) * m


# -----------------------------------------------------------------------------
# Generation-aware hardware info (VMEM capacity, TensorCore count).
# -----------------------------------------------------------------------------
_HW_CACHE = None


def _tpu_hw_info():
    global _HW_CACHE
    if _HW_CACHE is not None:
        return _HW_CACHE
    vmem_cap = None
    try:
        info = pltpu.get_tpu_info()
        cap = getattr(info, "vmem_capacity_bytes", None)
        vmem_cap = int(cap) if cap else None
    except Exception:
        vmem_cap = None
    kind = ""
    try:
        kind = jax.devices()[0].device_kind.lower()
    except Exception:
        pass
    if vmem_cap is None:
        if "v5" in kind or "v6" in kind:
            vmem_cap = 128 * 1024 * 1024
        else:                                   # v7x (and unknown): be conservative
            vmem_cap = 64 * 1024 * 1024
    num_cores = 2 if "v7" in kind else 1        # v7x has 2 TensorCores per chip
    _HW_CACHE = (vmem_cap, num_cores)
    return _HW_CACHE


# -----------------------------------------------------------------------------
# Pallas kernels: fused DLM logic-gate inference on a (tm, C_in) tile.
#   acc = f @ [W0 | W1] + [b0 | b1]     (single MXU matmul, f32 accumulation)
#   x0  = acc[:, :c_pad]   (soft selection of operand 0)
#   x1  = acc[:, c_pad:]   (soft selection of operand 1)
#   output column j (Q = C_out // 4, padded cols are dummies sliced off later):
#     j in [0,  Q): AND(x0, x1)     = x0 * x1
#     j in [Q, 2Q): OR (x0, x1)     = 1 - (1-x0)(1-x1)
#     j in [2Q,3Q): AND(x0, NOT x1) = x0 * (1 - x1)
#     j in [3Q,4Q): OR (x0, NOT x1) = 1 - (1-x0) * x1
# Gate selection uses two precomputed f32 rows (is_and, is_not) -> pure VPU
# mul/add, no integer divide / compare chains in the finalize.
# -----------------------------------------------------------------------------
def _gate_math(x, sel_ref, c_pad):
    x0 = x[:, :c_pad]
    x1 = x[:, c_pad:]
    is_and = sel_ref[0:1, :]                       # (1, c_pad) broadcast over rows
    is_not = sel_ref[1:2, :]
    y1 = x1 + is_not * (1.0 - 2.0 * x1)            # NOT on operand 1 where selected
    p = x0 * y1                                    # fuzzy AND
    orv = x0 + y1 - p                              # fuzzy OR
    return orv + is_and * (p - orv)


def _make_single_k_kernel(c_pad):
    """grid = (grid_m,): full reduction in one MXU pass, no accumulator scratch."""
    def kernel(f_ref, w_ref, b_ref, sel_ref, o_ref):
        x = jnp.dot(f_ref[...], w_ref[...],
                    preferred_element_type=jnp.float32) + b_ref[...]
        o_ref[...] = _gate_math(x, sel_ref, c_pad).astype(o_ref.dtype)
    return kernel


def _make_split_k_kernel(c_pad):
    """grid = (grid_m, grid_k): K-split with f32 accumulator (bias-initialized)."""
    def kernel(f_ref, w_ref, b_ref, sel_ref, o_ref, acc_ref):
        k = pl.program_id(1)

        @pl.when(k == 0)
        def _init():
            acc_ref[...] = jnp.broadcast_to(b_ref[...], acc_ref.shape)

        acc_ref[...] += jnp.dot(f_ref[...], w_ref[...],
                                preferred_element_type=jnp.float32)

        @pl.when(k == pl.num_programs(1) - 1)
        def _finalize():
            o_ref[...] = _gate_math(acc_ref[...], sel_ref, c_pad).astype(o_ref.dtype)
    return kernel


# -----------------------------------------------------------------------------
# Tiling helpers
# -----------------------------------------------------------------------------
def _vmem_estimate(tm, tk, c_pad, dot_bytes, out_bytes, with_acc):
    v = (2 * tm * tk * dot_bytes                # activation tile (double buffered)
         + 2 * tk * 2 * c_pad * dot_bytes       # fused weight block (double buffered)
         + 2 * tm * c_pad * out_bytes           # output tile (double buffered)
         + 4 * 2 * c_pad * 4 + 4 * c_pad * 4)   # bias row + gate selector rows
    if with_acc:
        v += tm * 2 * c_pad * 4                 # f32 accumulator scratch
    return v


def _fit_tm(tm, tk, c_pad, dot_bytes, out_bytes, budget, with_acc):
    while tm > 128 and _vmem_estimate(tm, tk, c_pad, dot_bytes, out_bytes,
                                      with_acc) > budget:
        tm = max(128, _round_up(tm // 2, _SUBLANE_BF16))
    return tm


def _pick_tiles(m, c_in, c_pad, dot_bytes, out_bytes, budget, num_cores,
                tile_m, tile_k):
    """Returns (tm, tk, c_in_padded)."""
    cout2 = 2 * c_pad
    tm_target = max(128, _round_up(tile_m, _SUBLANE_BF16))
    tm = min(tm_target, max(128, _round_up(m, _SUBLANE_BF16)))

    def _single_block(tm):
        # One row block covers M: split in two only if a 2nd TensorCore exists.
        if num_cores >= 2 and m > 256:
            return _round_up((m + 1) // 2, _SUBLANE_BF16)
        return m

    # --- Full-K: fused weight stays VMEM-resident across the entire grid -----
    w_resident = 2 * c_in * cout2 * dot_bytes
    full_k_ok = (tile_k is None or tile_k >= c_in) and w_resident <= budget // 2
    if full_k_ok:
        tk = c_in
        tm = _fit_tm(tm, tk, c_pad, dot_bytes, out_bytes, budget, with_acc=False)
        if _vmem_estimate(tm, tk, c_pad, dot_bytes, out_bytes, False) <= budget:
            if m <= tm:
                tm = _single_block(tm)
            return tm, tk, c_in

    # --- K-split: pad C_in up so tk is always a clean multiple of 128 --------
    tm = min(tm_target, max(128, _round_up(m, _SUBLANE_BF16)))
    if tile_k is not None and tile_k < c_in:
        assert tile_k % _LANE == 0, "tile_k must be a multiple of 128"
        tk = tile_k
    else:
        tk = _LANE
        for cand in (1024, 512, 256):           # deeper K per MXU push on v6e/v7x
            blk = 2 * cand * cout2 * dot_bytes
            if cand < c_in and _round_up(c_in, _LANE) % cand == 0 and blk <= budget // 3:
                tk = cand
                break
    c_in_p = _round_up(c_in, tk)

    # Over budget: shrink tk first (keeps the MXU row dim fat), then tm (>=128).
    while _vmem_estimate(tm, tk, c_pad, dot_bytes, out_bytes, True) > budget:
        if tk > _LANE:
            tk = max(_LANE, _round_up(tk // 2, _LANE))
            c_in_p = _round_up(c_in, tk)
        elif tm > 128:
            tm = max(128, _round_up(tm // 2, _SUBLANE_BF16))
        else:
            break
    if m <= tm:
        tm = _single_block(tm)
    return tm, tk, c_in_p


# -----------------------------------------------------------------------------
# DLM logic inference wrapper
# -----------------------------------------------------------------------------
def dlm_inference(f, weight, *, use_pallas="auto", dot_dtype=jnp.bfloat16,
                  out_dtype=jnp.float32, tile_m=512, tile_k=None,
                  min_pallas_rows=128):
    """DLM logic inference. f: (..., C_in), weight: (C_out, 2, C_in + 1)."""
    *batch, c_in = f.shape
    c_out = weight.shape[0]
    assert c_out % 4 == 0 and c_out >= 4, "output_dim must be a multiple of 4"
    q = c_out // 4

    sel = jax.nn.softmax(weight.astype(jnp.float32), axis=-1)   # (C_out, 2, C_in+1)
    w0 = jnp.transpose(sel[:, 0, :c_in])                        # (C_in, C_out)
    w1 = jnp.transpose(sel[:, 1, :c_in])
    b0 = sel[:, 0, c_in][None, :]                               # (1, C_out) constant-True
    b1 = sel[:, 1, c_in][None, :]

    m = math.prod(batch) if batch else 1
    f2 = f.reshape(m, c_in)

    run_pallas = (use_pallas is True) or (use_pallas == "auto" and m >= min_pallas_rows)
    if not run_pallas:
        # Tiny groups: a Pallas launch costs more than the whole compute.
        x0 = f2.astype(jnp.float32) @ w0 + b0
        x1 = f2.astype(jnp.float32) @ w1 + b1
        col = jnp.arange(c_out)[None, :]
        y1 = jnp.where(col >= 2 * q, 1.0 - x1, x1)
        is_and = (col // q) % 2 == 0
        out = jnp.where(is_and, x0 * y1, 1.0 - (1.0 - x0) * (1.0 - y1))
        return out.astype(out_dtype).reshape(*batch, c_out)

    vmem_cap, num_cores = _tpu_hw_info()
    budget = int(vmem_cap * 0.65)              # ~83 MiB on v5e/v6e, ~42 MiB on v7x

    # Lane-dense output: pad C_out to a multiple of 128 with dummy columns.
    c_pad = _round_up(c_out, _LANE)
    dot_bytes = jnp.dtype(dot_dtype).itemsize
    out_bytes = jnp.dtype(out_dtype).itemsize

    tm, tk, c_in_p = _pick_tiles(m, c_in, c_pad, dot_bytes, out_bytes, budget,
                                 num_cores, tile_m, tile_k)

    pad_cols = c_pad - c_out
    pad_rows = c_in_p - c_in
    w_fused = jnp.concatenate(
        [jnp.pad(w0, ((0, pad_rows), (0, pad_cols))),
         jnp.pad(w1, ((0, pad_rows), (0, pad_cols)))],
        axis=1).astype(dot_dtype)                               # (C_in_p, 2*c_pad)
    b_fused = jnp.concatenate(
        [jnp.pad(b0, ((0, 0), (0, pad_cols))),
         jnp.pad(b1, ((0, 0), (0, pad_cols)))], axis=1)         # (1, 2*c_pad), f32
    col = jnp.arange(c_pad)
    gate_sel = jnp.stack(
        [((col // q) % 2 == 0).astype(jnp.float32),             # 1.0 -> AND gate
         (col >= 2 * q).astype(jnp.float32)], axis=0)           # 1.0 -> NOT operand 1

    f2 = f2.astype(dot_dtype)                  # bf16 into the MXU, f32 accumulation
    if pad_rows:
        f2 = jnp.pad(f2, ((0, 0), (0, pad_rows)))

    grid_m = pl.cdiv(m, tm)                    # partial last row block handled by Pallas
    grid_k = c_in_p // tk

    if grid_k == 1:
        kernel = _make_single_k_kernel(c_pad)
        grid = (grid_m,)
        in_specs = [
            pl.BlockSpec((tm, tk), lambda i: (i, 0)),
            pl.BlockSpec((tk, 2 * c_pad), lambda i: (0, 0)),     # resident weight
            pl.BlockSpec((1, 2 * c_pad), lambda i: (0, 0)),
            pl.BlockSpec((2, c_pad), lambda i: (0, 0)),
        ]
        out_specs = pl.BlockSpec((tm, c_pad), lambda i: (i, 0))
        scratch = []
        dims = ("parallel",)
        with_acc = False
    else:
        kernel = _make_split_k_kernel(c_pad)
        grid = (grid_m, grid_k)
        in_specs = [
            pl.BlockSpec((tm, tk), lambda i, k: (i, k)),
            pl.BlockSpec((tk, 2 * c_pad), lambda i, k: (k, 0)),
            pl.BlockSpec((1, 2 * c_pad), lambda i, k: (0, 0)),
            pl.BlockSpec((2, c_pad), lambda i, k: (0, 0)),
        ]
        out_specs = pl.BlockSpec((tm, c_pad), lambda i, k: (i, 0))
        scratch = [pltpu.VMEM((tm, 2 * c_pad), jnp.float32)]
        dims = ("parallel", "arbitrary")
        with_acc = True

    est = _vmem_estimate(tm, tk, c_pad, dot_bytes, out_bytes, with_acc)
    vmem_limit = int(min(vmem_cap * 9 // 10,
                         max(32 * 1024 * 1024, est * 3 // 2 + (4 << 20))))

    out = pl.pallas_call(
        kernel,
        out_shape=jax.ShapeDtypeStruct((m, c_pad), out_dtype),
        grid_spec=pltpu.PrefetchScalarGridSpec(
            num_scalar_prefetch=0,
            grid=grid,
            in_specs=in_specs,
            out_specs=out_specs,
            scratch_shapes=scratch),
        compiler_params=pltpu.CompilerParams(
            dimension_semantics=dims,
            vmem_limit_bytes=vmem_limit),
    )(f2, w_fused, b_fused, gate_sel)

    if c_pad != c_out:
        out = out[:, :c_out]
    return out.reshape(*batch, c_out)


# -----------------------------------------------------------------------------
# Glue modules (plain JAX): Expander / Reducer / Permutation from the NLM stack.
# -----------------------------------------------------------------------------
def expander(x, dim, n):
    """Expander(dim): add one object axis of size n after axis `dim`."""
    x = jnp.expand_dims(x, dim + 1)
    shape = list(x.shape)
    shape[dim + 1] = n
    return jnp.broadcast_to(x, shape)


def _exclude_mask(x, cnt):
    """Mutual-exclusion mask over the cnt object axes just before channels."""
    n = x.shape[-2]
    idx = [lax.broadcasted_iota(jnp.int32, (n,) * cnt, k) for k in range(cnt)]
    mask = jnp.ones((n,) * cnt, dtype=bool)
    for a in range(cnt):
        for b in range(cnt):
            if a != b:
                mask = mask & (idx[a] != idx[b])
    mask = mask.reshape((1,) * (x.ndim - cnt - 1) + mask.shape + (1,))
    return jnp.broadcast_to(mask, x.shape)


def reducer(x, cnt, exclude_self=True):
    """Reducer(cnt): exists/forall reduce over the last object axis."""
    if exclude_self:
        mask = _exclude_mask(x, cnt)
        inp0 = jnp.where(mask, x, 0.0)
        inp1 = jnp.where(mask, x, 1.0)
    else:
        inp0 = inp1 = x
    exists = jnp.max(inp0, axis=-2)
    forall = jnp.min(inp1, axis=-2)
    out = jnp.stack([exists, forall], axis=-1)               # interleave e0,f0,e1,f1,...
    return out.reshape(*out.shape[:-2], out.shape[-2] * 2)


def permutation(x, dim):
    """Permutation(dim): concat all permutations of the dim object axes."""
    if dim <= 1:
        return x
    nd = x.ndim
    start = nd - 1 - dim
    res = []
    for perm in itertools.permutations(range(start, nd - 1)):
        p = tuple(range(start)) + perm + (nd - 1,)
        res.append(jnp.transpose(x, p))
    return jnp.concatenate(res, axis=-1)


# -----------------------------------------------------------------------------
# DLMLayer forward (training path, paths=None)
# -----------------------------------------------------------------------------
class DLMLayerPallas:
    def __init__(self, breadth, input_dims, output_dims, key,
                 exclude_self=True, residual=False):
        assert breadth > 0
        self.max_order = breadth
        self.exclude_self = exclude_self
        self.residual = residual
        if isinstance(input_dims, int):
            input_dims = [input_dims] * (breadth + 1)
        if isinstance(output_dims, int):
            output_dims = [output_dims] * (breadth + 1)
        self.input_dims = list(input_dims)
        self.output_dims = list(output_dims)

        # Deterministic parameter init: logic[i].weight has shape
        # (output_dims[i], 2, current_dim + 1), current_dim as in __init__.
        self.weights = []
        for i in range(breadth + 1):
            current_dim = self.input_dims[i]
            if i > 0:
                current_dim += self.input_dims[i - 1]            # Expander output dim
            if i + 1 < breadth + 1:
                current_dim += self.input_dims[i + 1] * 2        # Reducer output dim
            if current_dim == 0:
                self.weights.append(None)
                self.output_dims[i] = 0
                continue
            current_dim *= math.factorial(i)                     # Permutation output dim
            key, sub = jax.random.split(key)
            w = jax.random.normal(sub, (self.output_dims[i], 2, current_dim + 1),
                                  dtype=jnp.float32)
            self.weights.append(w)

    def __call__(self, inputs, use_pallas="auto", dot_dtype=jnp.bfloat16,
                 out_dtype=jnp.float32, tile_m=512, tile_k=None):
        assert len(inputs) == self.max_order + 1
        outputs = []
        for i in range(self.max_order + 1):
            f = []
            if i > 0 and self.input_dims[i - 1] > 0:
                n = inputs[i].shape[1] if i == 1 else inputs[i - 1].shape[-2]
                f.append(expander(inputs[i - 1], i - 1, n))
            if self.input_dims[i] > 0:
                f.append(inputs[i])
            if i + 1 < self.max_order + 1 and self.input_dims[i + 1] > 0:
                f.append(reducer(inputs[i + 1], i + 1, self.exclude_self))
            if len(f) == 0:
                outputs.append(None)
                continue
            f = jnp.concatenate(f, axis=-1)
            f = permutation(f, i)
            out = dlm_inference(f, self.weights[i], use_pallas=use_pallas,
                                dot_dtype=dot_dtype, out_dtype=out_dtype,
                                tile_m=tile_m, tile_k=tile_k)
            if self.residual and self.input_dims[i] > 0:
                out = jnp.concatenate([inputs[i], out.astype(inputs[i].dtype)], axis=-1)
            outputs.append(out)
        return outputs


if __name__ == "__main__":
    key = jax.random.PRNGKey(0)

    # --- DLMLayer demo at the module's natural (small) shapes ------------------
    B, N = 2, 8
    breadth = 2
    input_dims = [4, 4, 4]          # nullary / unary / binary predicate channels
    output_dims = 8                 # per-group output channels (multiple of 4)

    k0, k1, k2, kw = jax.random.split(key, 4)
    inputs = [
        jax.random.uniform(k0, (B, input_dims[0]), dtype=jnp.float32),
        jax.random.uniform(k1, (B, N, input_dims[1]), dtype=jnp.float32),
        jax.random.uniform(k2, (B, N, N, input_dims[2]), dtype=jnp.float32),
    ]

    layer = DLMLayerPallas(breadth, input_dims, output_dims, key=kw,
                           exclude_self=True, residual=False)

    # "auto": tiny groups (M=2, M=16) bypass Pallas; the binary group
    # (M = B*N*N = 128) runs the resident-weight single-K Pallas kernel (bf16 MXU).
    outs = layer(inputs, use_pallas="auto", dot_dtype=jnp.bfloat16)
    for o in outs:
        jax.block_until_ready(o)

    # Shape checks (group i output: (B, N^i, ..., output_dims[i]))
    assert outs[0].shape == (B, 8)
    assert outs[1].shape == (B, N, 8)
    assert outs[2].shape == (B, N, N, 8)

    refs = layer(inputs, use_pallas=False)
    for o, r in zip(outs, refs):
        assert jnp.allclose(o, r, atol=3e-2, rtol=3e-2), "bf16 path mismatch vs reference"

    # Strict check of the kernel logic: force Pallas for every group, f32 MXU inputs.
    outs_f32 = layer(inputs, use_pallas=True, dot_dtype=jnp.float32)
    for o, r in zip(outs_f32, refs):
        jax.block_until_ready(o)
        assert jnp.allclose(o, r, atol=1e-3, rtol=1e-3), "f32 path mismatch vs reference"

    # --- Larger standalone check: multi-tile row grid with a partial last block,
    #     (a) K-split accumulator path (forced tile_k=128), (b) resident-weight
    #     single-K path (auto), (c) bf16 output path ------------------------------
    M2, CIN2, COUT2 = 1003, 512, 128
    kf, kw2 = jax.random.split(kw)
    f_big = jax.random.uniform(kf, (M2, CIN2), dtype=jnp.float32)
    w_big = jax.random.normal(kw2, (COUT2, 2, CIN2 + 1), dtype=jnp.float32)

    ref_big = dlm_inference(f_big, w_big, use_pallas=False)
    out_big_split = dlm_inference(f_big, w_big, use_pallas=True,
                                  dot_dtype=jnp.bfloat16, tile_m=512, tile_k=128)
    out_big_f32 = dlm_inference(f_big, w_big, use_pallas=True,
                                dot_dtype=jnp.float32, tile_m=512)
    out_big_bf16o = dlm_inference(f_big, w_big, use_pallas=True,
                                  dot_dtype=jnp.bfloat16, out_dtype=jnp.bfloat16)
    jax.block_until_ready(out_big_split)
    jax.block_until_ready(out_big_f32)
    jax.block_until_ready(out_big_bf16o)
    assert out_big_split.shape == (M2, COUT2)
    assert jnp.allclose(out_big_split, ref_big, atol=3e-2, rtol=3e-2), "K-split bf16 mismatch"
    assert jnp.allclose(out_big_f32, ref_big, atol=2e-3, rtol=2e-3), "resident-K f32 mismatch"
    assert jnp.allclose(out_big_bf16o.astype(jnp.float32), ref_big,
                        atol=5e-2, rtol=5e-2), "bf16-output mismatch"

    print("KERNEL_OK")
</pallas_src>

<mosaic_0001>
module attributes {stable_mosaic.version = 11 : i64} {
  func.func @kernel(%arg0: i32, %arg1: memref<128x16xbf16, #tpu.memory_space<vmem>>, %arg2: memref<16x256xbf16, #tpu.memory_space<vmem>>, %arg3: memref<1x256xf32, #tpu.memory_space<vmem>>, %arg4: memref<2x128xf32, #tpu.memory_space<vmem>>, %arg5: memref<128x128xf32, #tpu.memory_space<vmem>>) attributes {dimension_semantics = [#tpu.dimension_semantics<parallel>], iteration_bounds = array<i64: 1>, scalar_prefetch = 0 : i64, scratch_operands = 0 : i64, tpu.core_type = #tpu.core_type<tc>, window_params = [{transform_indices = @transform_0, window_bounds = array<i64: 128, 16>}, {pipeline_mode = #tpu.pipeline_mode<synchronous>, transform_indices = @transform_1, window_bounds = array<i64: 16, 256>}, {pipeline_mode = #tpu.pipeline_mode<synchronous>, transform_indices = @transform_2, window_bounds = array<i64: 1, 256>}, {pipeline_mode = #tpu.pipeline_mode<synchronous>, transform_indices = @transform_3, window_bounds = array<i64: 2, 128>}, {transform_indices = @transform_4, window_bounds = array<i64: 128, 128>}]} {
    %c0 = arith.constant 0 : index
    %c0_0 = arith.constant 0 : index
    %0 = vector.load %arg1[%c0, %c0_0] : memref<128x16xbf16, #tpu.memory_space<vmem>>, vector<128x16xbf16>
    %c0_1 = arith.constant 0 : index
    %c0_2 = arith.constant 0 : index
    %1 = vector.load %arg2[%c0_1, %c0_2] : memref<16x256xbf16, #tpu.memory_space<vmem>>, vector<16x256xbf16>
    %cst = arith.constant dense<0.000000e+00> : vector<128x256xf32>
    %2 = tpu.matmul %0, %1, %cst {dimension_numbers = #tpu.dot_dimension_numbers<[1], [0], [0], [1], [0, 0, 1, 1], [], []>} : vector<128x16xbf16>, vector<16x256xbf16>, vector<128x256xf32> -> vector<128x256xf32>
    %c0_3 = arith.constant 0 : index
    %c0_4 = arith.constant 0 : index
    %3 = vector.load %arg3[%c0_3, %c0_4] : memref<1x256xf32, #tpu.memory_space<vmem>>, vector<1x256xf32>
    %4 = vector.broadcast %3 : vector<1x256xf32> to vector<128x256xf32>
    %5 = arith.addf %2, %4 : vector<128x256xf32>
    %6 = vector.extract_strided_slice %5 {offsets = [0, 0], sizes = [128, 128], strides = [1, 1]} : vector<128x256xf32> to vector<128x128xf32>
    %7 = vector.extract_strided_slice %5 {offsets = [0, 128], sizes = [128, 128], strides = [1, 1]} : vector<128x256xf32> to vector<128x128xf32>
    %c0_5 = arith.constant 0 : index
    %c0_6 = arith.constant 0 : index
    %8 = vector.load %arg4[%c0_5, %c0_6] : memref<2x128xf32, #tpu.memory_space<vmem>>, vector<1x128xf32>
    %c1 = arith.constant 1 : index
    %c0_7 = arith.constant 0 : index
    %9 = vector.load %arg4[%c1, %c0_7] : memref<2x128xf32, #tpu.memory_space<vmem>>, vector<1x128xf32>
    %cst_8 = arith.constant 2.000000e+00 : f32
    %10 = vector.broadcast %cst_8 : f32 to vector<128x128xf32>
    %11 = arith.mulf %10, %7 : vector<128x128xf32>
    %cst_9 = arith.constant 1.000000e+00 : f32
    %12 = vector.broadcast %cst_9 : f32 to vector<128x128xf32>
    %13 = arith.subf %12, %11 : vector<128x128xf32>
    %14 = vector.broadcast %9 : vector<1x128xf32> to vector<128x128xf32>
    %15 = arith.mulf %14, %13 : vector<128x128xf32>
    %16 = arith.addf %7, %15 : vector<128x128xf32>
    %17 = arith.mulf %6, %16 : vector<128x128xf32>
    %18 = arith.addf %6, %16 : vector<128x128xf32>
    %19 = arith.subf %18, %17 : vector<128x128xf32>
    %20 = arith.subf %17, %19 : vector<128x128xf32>
    %21 = vector.broadcast %8 : vector<1x128xf32> to vector<128x128xf32>
    %22 = arith.mulf %21, %20 : vector<128x128xf32>
    %23 = arith.addf %19, %22 : vector<128x128xf32>
    %c0_10 = arith.constant 0 : index
    %c0_11 = arith.constant 0 : index
    %24 = vector.load %arg5[%c0_10, %c0_11] : memref<128x128xf32, #tpu.memory_space<vmem>>, vector<128x128xf32>
    tpu.vector_store %arg5[%c0_10, %c0_11], %23 {strides = array<i32>} : memref<128x128xf32, #tpu.memory_space<vmem>>, vector<128x128xf32>,
    return
  }
  func.func @transform_0(%arg0: i32) -> (i32, i32) {
    %c0_i32 = arith.constant 0 : i32
    %c0_i32_0 = arith.constant 0 : i32
    return %arg0, %c0_i32 : i32, i32
  }
  func.func @transform_1(%arg0: i32) -> (i32, i32) {
    %c0_i32 = arith.constant 0 : i32
    %c0_i32_0 = arith.constant 0 : i32
    %c0_i32_1 = arith.constant 0 : i32
    return %c0_i32, %c0_i32_0 : i32, i32
  }
  func.func @transform_2(%arg0: i32) -> (i32, i32) {
    %c0_i32 = arith.constant 0 : i32
    %c0_i32_0 = arith.constant 0 : i32
    %c0_i32_1 = arith.constant 0 : i32
    return %c0_i32, %c0_i32_0 : i32, i32
  }
  func.func @transform_3(%arg0: i32) -> (i32, i32) {
    %c0_i32 = arith.constant 0 : i32
    %c0_i32_0 = arith.constant 0 : i32
    %c0_i32_1 = arith.constant 0 : i32
    return %c0_i32, %c0_i32_0 : i32, i32
  }
  func.func @transform_4(%arg0: i32) -> (i32, i32) {
    %c0_i32 = arith.constant 0 : i32
    %c0_i32_0 = arith.constant 0 : i32
    return %arg0, %c0_i32 : i32, i32
  }
}

</mosaic_0001>

<llo_original>
// kernel: tpu_custom_call.1
$region0: #{tpu_custom_call.1}
  #allocation0 [shape = 'u32[]', space=smem, size = 0x4, offset = 0x4, fixed_abs, tag = 'smem constant byte address 0x4 - core index']
  #allocation1 [shape = 'u32[144,128]{1,0:T(1,128)}', space=vmem, size = 0x12000, scoped, tag = 'internal scratch']
  %s0 = inlined_call_operand.vmem [shape: bf16[128,16], index: 0, kind: input, shape index: {}]
  %s1 = inlined_call_operand.vmem [shape: bf16[16,256], index: 1, kind: input, shape index: {}]
  %s2 = inlined_call_operand.vmem [shape: f32[1,256], index: 2, kind: input, shape index: {}]
  %s3 = inlined_call_operand.vmem [shape: f32[2,128], index: 3, kind: input, shape index: {}]
  %s4 = inlined_call_operand.hbm [shape: f32[128,128], index: 4, kind: output, shape index: {}]
  %s5 = sld [smem:[#allocation0]]
  $region26: #{tpu_custom_call.1} parent=0
    _
  %s7 = ssub.s32 1, %s5
  %s8 = scalar_select 0, %s7, %s5
  $region1: #{tpu_custom_call.1} parent=0
    #allocation2 [shape = 'u8[65536]{0}', space=vmem, size = 0x10000, scoped, tag = 'output window, operand 0, single buffered']
    #allocation3 [shape = 's32[1]{0}', space=sflag, size = 0x4, scoped, tag = 'scoped memory for tpu_custom_call.1']
    %9 = vsyncpa [#allocation3], 0
    // Predicated region
    $region2: #{tpu_custom_call.1} parent=1 // pred_check
      _
    $region3: #{tpu_custom_call.1} parent=1 // pred_check_branch
      %11 = sbr.rel (0) target = $region5
    $region4: #{tpu_custom_call.1} parent=1 // pred_region
      _
    $region5: #{tpu_custom_call.1} parent=1 // pred_fallthru
      _
    // Predicated region
    $region6: #{tpu_custom_call.1} parent=1 // pred_check
      _
    $region7: #{tpu_custom_call.1} parent=1 // pred_check_branch
      %13 = sbr.rel (0) target = $region9
    $region8: #{tpu_custom_call.1} parent=1 // pred_region
      _
    $region9: #{tpu_custom_call.1} parent=1 // pred_fallthru
      _
    // Predicated region
    $region10: #{tpu_custom_call.1} parent=1 // pred_check
      _
    $region11: #{tpu_custom_call.1} parent=1 // pred_check_branch
      %15 = sbr.rel (0) target = $region13
    $region12: #{tpu_custom_call.1} parent=1 // pred_region
      _
    $region13: #{tpu_custom_call.1} parent=1 // pred_fallthru
      _
    // Predicated region
    $region14: #{tpu_custom_call.1} parent=1 // pred_check
      _
    $region15: #{tpu_custom_call.1} parent=1 // pred_check_branch
      %17 = sbr.rel (0) target = $region17
    $region16: #{tpu_custom_call.1} parent=1 // pred_region
      _
    $region17: #{tpu_custom_call.1} parent=1 // pred_fallthru
      _
    %v19 = vld [vmem:[%s0] sm:$0xf]
    %v20 = vld [vmem:[%s0 + $0x4] sm:$0xf]
    %v21 = vld [vmem:[%s0 + $0x8] sm:$0xf]
    %v22 = vld [vmem:[%s0 + $0xc] sm:$0xf]
    %v23 = vld [vmem:[%s0 + $0x10] sm:$0xf]
    %v24 = vld [vmem:[%s0 + $0x14] sm:$0xf]
    %v25 = vld [vmem:[%s0 + $0x18] sm:$0xf]
    %v26 = vld [vmem:[%s0 + $0x1c] sm:$0xf]
    %v27 = vld [vmem:[%s0 + $0x20] sm:$0xf]
    %v28 = vld [vmem:[%s0 + $0x24] sm:$0xf]
    %v29 = vld [vmem:[%s0 + $0x28] sm:$0xf]
    %v30 = vld [vmem:[%s0 + $0x2c] sm:$0xf]
    %v31 = vld [vmem:[%s0 + $0x30] sm:$0xf]
    %v32 = vld [vmem:[%s0 + $0x34] sm:$0xf]
    %v33 = vld [vmem:[%s0 + $0x38] sm:$0xf]
    %v34 = vld [vmem:[%s0 + $0x3c] sm:$0xf]
    %v35 = vld [vmem:[%s1] sm:$0xff]
    %v36 = vld [vmem:[%s1 + $0x8] sm:$0xff]
    %v37 = vld [vmem:[%s2] sm:$0x3]
    %v39 = vlaneseq
    %v40 = vshrl.u32 %v39, 7
    %v41 = vsub.s32 0, %v40
    %v42 = vrot.slane %v37, %v41
    %v43 = vlaneseq
    %v44 = vshrl.u32 %v43, 7
    %v45 = vsub.s32 1, %v44
    %v46 = vrot.slane %v37, %v45
    %v65 = vunpack.c.l.b16 %v19
    %v66 = vunpack.c.l.b16 %v20
    %v67 = vunpack.c.l.b16 %v21
    %v68 = vunpack.c.l.b16 %v22
    %v69 = vunpack.c.l.b16 %v23
    %v70 = vunpack.c.l.b16 %v24
    %v71 = vunpack.c.l.b16 %v25
    %v72 = vunpack.c.l.b16 %v26
    %v73 = vunpack.c.l.b16 %v27
    %v74 = vunpack.c.l.b16 %v28
    %v75 = vunpack.c.l.b16 %v29
    %v76 = vunpack.c.l.b16 %v30
    %v77 = vunpack.c.l.b16 %v31
    %v78 = vunpack.c.l.b16 %v32
    %v79 = vunpack.c.l.b16 %v33
    %v80 = vunpack.c.l.b16 %v34
    %v81 = vpack.c.b16 %v66, %v65
    %v82 = vpack.c.b16 %v68, %v67
    %v83 = vpack.c.b16 %v70, %v69
    %v84 = vpack.c.b16 %v72, %v71
    %v85 = vpack.c.b16 %v74, %v73
    %v86 = vpack.c.b16 %v76, %v75
    %v87 = vpack.c.b16 %v78, %v77
    %v88 = vpack.c.b16 %v80, %v79
    %v91 = vunpack.c.l.b16 %v35
    %v92 = vunpack.c.h.b16 %v35
    %v93 = vunpack.c.l.b16 %v36
    %v94 = vunpack.c.h.b16 %v36
    %v95 = vpack.c.b16 %v93, %v91
    %v96 = vpack.c.b16 %v94, %v92
    %vm99 = vcmask 130048
    %v101 = vsel %vm99, %v81, 0
    %v104 = vsel %vm99, %v82, 0
    %v107 = vsel %vm99, %v83, 0
    %v110 = vsel %vm99, %v84, 0
    %v113 = vsel %vm99, %v85, 0
    %v116 = vsel %vm99, %v86, 0
    %v119 = vsel %vm99, %v87, 0
    %v122 = vsel %vm99, %v88, 0
    %124 = vmatprep.subr.bf16.mxu0 0
    %125 = vmatpush1.bf16.msra.mxu0 0
    %126 = vmatprep.subr.bf16.mxu0 0
    %127 = vmatpush1.bf16.msra.mxu0 0
    %128 = vmatprep.subr.bf16.mxu0 0
    %129 = vmatpush1.bf16.msra.mxu0 0
    %130 = vmatprep.subr.bf16.mxu0 0
    %131 = vmatpush1.bf16.msra.mxu0 0
    %132 = vmatprep.subr.bf16.mxu0 0
    %133 = vmatpush1.bf16.msra.mxu0 0
    %134 = vmatprep.subr.bf16.mxu0 0
    %135 = vmatpush1.bf16.msra.mxu0 0
    %136 = vmatprep.subr.bf16.mxu0 0
    %137 = vmatpush1.bf16.msra.mxu0 0
    %138 = vmatprep.subr.bf16.mxu0 %v96
    %139 = vmatpush1.bf16.msra.mxu0 %v95
    %140 = vmatprep.subr.bf16.mxu0 0
    %141 = vmatpush2.bf16.msra.mxu0 0
    %142 = vmatprep.subr.bf16.mxu0 0
    %143 = vmatpush2.bf16.msra.mxu0 0
    %144 = vmatprep.subr.bf16.mxu0 0
    %145 = vmatpush2.bf16.msra.mxu0 0
    %146 = vmatprep.subr.bf16.mxu0 0
    %147 = vmatpush2.bf16.msra.mxu0 0
    %148 = vmatprep.subr.bf16.mxu0 0
    %149 = vmatpush2.bf16.msra.mxu0 0
    %150 = vmatprep.subr.bf16.mxu0 0
    %151 = vmatpush2.bf16.msra.mxu0 0
    %152 = vmatprep.subr.bf16.mxu0 0
    %153 = vmatpush2.bf16.msra.mxu0 0
    %154 = vmatprep.subr.bf16.mxu0 0
    %155 = vmatpush2.bf16.msra.mxu0 0
    %156 = vmatprep.mubr.bf16.mxu0 0
    %157 = vmatmul.mubr.bf16.gmra.mxu0 %v101
    %v158 = vpop.f32.mrf.mxu0
    %v159 = vadd.f32 %v42, %v158
    %v160 = vpop.f32.mrf.mxu0
    %v161 = vadd.f32 %v46, %v160
    %v162 = vpop.f32.mrf.mxu0
    %v163 = vadd.f32 %v42, %v162
    %v164 = vpop.f32.mrf.mxu0
    %v165 = vadd.f32 %v46, %v164
    %166 = vmatprep.mubr.bf16.mxu0 0
    %167 = vmatmul.mubr.bf16.gmra.mxu0 %v104
    %v168 = vpop.f32.mrf.mxu0
    %v169 = vadd.f32 %v42, %v168
    %v170 = vpop.f32.mrf.mxu0
    %v171 = vadd.f32 %v46, %v170
    %v172 = vpop.f32.mrf.mxu0
    %v173 = vadd.f32 %v42, %v172
    %v174 = vpop.f32.mrf.mxu0
    %v175 = vadd.f32 %v46, %v174
    %176 = vmatprep.mubr.bf16.mxu0 0
    %177 = vmatmul.mubr.bf16.gmra.mxu0 %v107
    %v178 = vpop.f32.mrf.mxu0
    %v179 = vadd.f32 %v42, %v178
    %v180 = vpop.f32.mrf.mxu0
    %v181 = vadd.f32 %v46, %v180
    %v182 = vpop.f32.mrf.mxu0
    %v183 = vadd.f32 %v42, %v182
    %v184 = vpop.f32.mrf.mxu0
    %v185 = vadd.f32 %v46, %v184
    %186 = vmatprep.mubr.bf16.mxu0 0
    %187 = vmatmul.mubr.bf16.gmra.mxu0 %v110
    %v188 = vpop.f32.mrf.mxu0
    %v189 = vadd.f32 %v42, %v188
    %v190 = vpop.f32.mrf.mxu0
    %v191 = vadd.f32 %v46, %v190
    %v192 = vpop.f32.mrf.mxu0
    %v193 = vadd.f32 %v42, %v192
    %v194 = vpop.f32.mrf.mxu0
    %v195 = vadd.f32 %v46, %v194
    %196 = vmatprep.mubr.bf16.mxu0 0
    %197 = vmatmul.mubr.bf16.gmra.mxu0 %v113
    %v198 = vpop.f32.mrf.mxu0
    %v199 = vadd.f32 %v42, %v198
    %v200 = vpop.f32.mrf.mxu0
    %v201 = vadd.f32 %v46, %v200
    %v202 = vpop.f32.mrf.mxu0
    %v203 = vadd.f32 %v42, %v202
    %v204 = vpop.f32.mrf.mxu0
    %v205 = vadd.f32 %v46, %v204
    %206 = vmatprep.mubr.bf16.mxu0 0
    %207 = vmatmul.mubr.bf16.gmra.mxu0 %v116
    %v208 = vpop.f32.mrf.mxu0
    %v209 = vadd.f32 %v42, %v208
    %v210 = vpop.f32.mrf.mxu0
    %v211 = vadd.f32 %v46, %v210
    %v212 = vpop.f32.mrf.mxu0
    %v213 = vadd.f32 %v42, %v212
    %v214 = vpop.f32.mrf.mxu0
    %v215 = vadd.f32 %v46, %v214
    %216 = vmatprep.mubr.bf16.mxu0 0
    %217 = vmatmul.mubr.bf16.gmra.mxu0 %v119
    %v218 = vpop.f32.mrf.mxu0
    %v219 = vadd.f32 %v42, %v218
    %v220 = vpop.f32.mrf.mxu0
    %v221 = vadd.f32 %v46, %v220
    %v222 = vpop.f32.mrf.mxu0
    %v223 = vadd.f32 %v42, %v222
    %v224 = vpop.f32.mrf.mxu0
    %v225 = vadd.f32 %v46, %v224
    %226 = vmatprep.mubr.bf16.mxu0 0
    %227 = vmatmul.mubr.bf16.gmra.mxu0 %v122
    %v228 = vpop.f32.mrf.mxu0
    %v229 = vadd.f32 %v42, %v228
    %v230 = vpop.f32.mrf.mxu0
    %v231 = vadd.f32 %v46, %v230
    %v232 = vpop.f32.mrf.mxu0
    %v233 = vadd.f32 %v42, %v232
    %v234 = vpop.f32.mrf.mxu0
    %v235 = vadd.f32 %v46, %v234
    %236 = vdwg.mxu0
    %v237 = vld [vmem:[%s3] sm:$0x1]
    %v238 = vld [vmem:[%s3 + $0x1] sm:$0x1]
    %v239 = vmul.f32 %v161, 2.0
    %v240 = vmul.f32 %v165, 2.0
    %v241 = vmul.f32 %v171, 2.0
    %v242 = vmul.f32 %v175, 2.0
    %v243 = vmul.f32 %v181, 2.0
    %v244 = vmul.f32 %v185, 2.0
    %v245 = vmul.f32 %v191, 2.0
    %v246 = vmul.f32 %v195, 2.0
    %v247 = vmul.f32 %v201, 2.0
    %v248 = vmul.f32 %v205, 2.0
    %v249 = vmul.f32 %v211, 2.0
    %v250 = vmul.f32 %v215, 2.0
    %v251 = vmul.f32 %v221, 2.0
    %v252 = vmul.f32 %v225, 2.0
    %v253 = vmul.f32 %v231, 2.0
    %v254 = vmul.f32 %v235, 2.0
    %v255 = vsub.f32 1.0, %v239
    %v256 = vsub.f32 1.0, %v240
    %v257 = vsub.f32 1.0, %v241
    %v258 = vsub.f32 1.0, %v242
    %v259 = vsub.f32 1.0, %v243
    %v260 = vsub.f32 1.0, %v244
    %v261 = vsub.f32 1.0, %v245
    %v262 = vsub.f32 1.0, %v246
    %v263 = vsub.f32 1.0, %v247
    %v264 = vsub.f32 1.0, %v248
    %v265 = vsub.f32 1.0, %v249
    %v266 = vsub.f32 1.0, %v250
    %v267 = vsub.f32 1.0, %v251
    %v268 = vsub.f32 1.0, %v252
    %v269 = vsub.f32 1.0, %v253
    %v270 = vsub.f32 1.0, %v254
    %v271 = vlaneseq
    %v272 = vshrl.u32 %v271, 7
    %v273 = vsub.s32 0, %v272
    %v274 = vrot.slane %v238, %v273
    %v275 = vmul.f32 %v274, %v255
    %v276 = vmul.f32 %v274, %v256
    %v277 = vmul.f32 %v274, %v257
    %v278 = vmul.f32 %v274, %v258
    %v279 = vmul.f32 %v274, %v259
    %v280 = vmul.f32 %v274, %v260
    %v281 = vmul.f32 %v274, %v261
    %v282 = vmul.f32 %v274, %v262
    %v283 = vmul.f32 %v274, %v263
    %v284 = vmul.f32 %v274, %v264
    %v285 = vmul.f32 %v274, %v265
    %v286 = vmul.f32 %v274, %v266
    %v287 = vmul.f32 %v274, %v267
    %v288 = vmul.f32 %v274, %v268
    %v289 = vmul.f32 %v274, %v269
    %v290 = vmul.f32 %v274, %v270
    %v291 = vadd.f32 %v161, %v275
    %v292 = vadd.f32 %v165, %v276
    %v293 = vadd.f32 %v171, %v277
    %v294 = vadd.f32 %v175, %v278
    %v295 = vadd.f32 %v181, %v279
    %v296 = vadd.f32 %v185, %v280
    %v297 = vadd.f32 %v191, %v281
    %v298 = vadd.f32 %v195, %v282
    %v299 = vadd.f32 %v201, %v283
    %v300 = vadd.f32 %v205, %v284
    %v301 = vadd.f32 %v211, %v285
    %v302 = vadd.f32 %v215, %v286
    %v303 = vadd.f32 %v221, %v287
    %v304 = vadd.f32 %v225, %v288
    %v305 = vadd.f32 %v231, %v289
    %v306 = vadd.f32 %v235, %v290
    %v307 = vmul.f32 %v159, %v291
    %v308 = vmul.f32 %v163, %v292
    %v309 = vmul.f32 %v169, %v293
    %v310 = vmul.f32 %v173, %v294
    %v311 = vmul.f32 %v179, %v295
    %v312 = vmul.f32 %v183, %v296
    %v313 = vmul.f32 %v189, %v297
    %v314 = vmul.f32 %v193, %v298
    %v315 = vmul.f32 %v199, %v299
    %v316 = vmul.f32 %v203, %v300
    %v317 = vmul.f32 %v209, %v301
    %v318 = vmul.f32 %v213, %v302
    %v319 = vmul.f32 %v219, %v303
    %v320 = vmul.f32 %v223, %v304
    %v321 = vmul.f32 %v229, %v305
    %v322 = vmul.f32 %v233, %v306
    %v323 = vadd.f32 %v159, %v291
    %v324 = vadd.f32 %v163, %v292
    %v325 = vadd.f32 %v169, %v293
    %v326 = vadd.f32 %v173, %v294
    %v327 = vadd.f32 %v179, %v295
    %v328 = vadd.f32 %v183, %v296
    %v329 = vadd.f32 %v189, %v297
    %v330 = vadd.f32 %v193, %v298
    %v331 = vadd.f32 %v199, %v299
    %v332 = vadd.f32 %v203, %v300
    %v333 = vadd.f32 %v209, %v301
    %v334 = vadd.f32 %v213, %v302
    %v335 = vadd.f32 %v219, %v303
    %v336 = vadd.f32 %v223, %v304
    %v337 = vadd.f32 %v229, %v305
    %v338 = vadd.f32 %v233, %v306
    %v339 = vsub.f32 %v323, %v307
    %v340 = vsub.f32 %v324, %v308
    %v341 = vsub.f32 %v325, %v309
    %v342 = vsub.f32 %v326, %v310
    %v343 = vsub.f32 %v327, %v311
    %v344 = vsub.f32 %v328, %v312
    %v345 = vsub.f32 %v329, %v313
    %v346 = vsub.f32 %v330, %v314
    %v347 = vsub.f32 %v331, %v315
    %v348 = vsub.f32 %v332, %v316
    %v349 = vsub.f32 %v333, %v317
    %v350 = vsub.f32 %v334, %v318
    %v351 = vsub.f32 %v335, %v319
    %v352 = vsub.f32 %v336, %v320
    %v353 = vsub.f32 %v337, %v321
    %v354 = vsub.f32 %v338, %v322
    %v355 = vsub.f32 %v307, %v339
    %v356 = vsub.f32 %v308, %v340
    %v357 = vsub.f32 %v309, %v341
    %v358 = vsub.f32 %v310, %v342
    %v359 = vsub.f32 %v311, %v343
    %v360 = vsub.f32 %v312, %v344
    %v361 = vsub.f32 %v313, %v345
    %v362 = vsub.f32 %v314, %v346
    %v363 = vsub.f32 %v315, %v347
    %v364 = vsub.f32 %v316, %v348
    %v365 = vsub.f32 %v317, %v349
    %v366 = vsub.f32 %v318, %v350
    %v367 = vsub.f32 %v319, %v351
    %v368 = vsub.f32 %v320, %v352
    %v369 = vsub.f32 %v321, %v353
    %v370 = vsub.f32 %v322, %v354
    %v371 = vlaneseq
    %v372 = vshrl.u32 %v371, 7
    %v373 = vsub.s32 0, %v372
    %v374 = vrot.slane %v237, %v373
    %v375 = vmul.f32 %v374, %v355
    %v376 = vmul.f32 %v374, %v356
    %v377 = vmul.f32 %v374, %v357
    %v378 = vmul.f32 %v374, %v358
    %v379 = vmul.f32 %v374, %v359
    %v380 = vmul.f32 %v374, %v360
    %v381 = vmul.f32 %v374, %v361
    %v382 = vmul.f32 %v374, %v362
    %v383 = vmul.f32 %v374, %v363
    %v384 = vmul.f32 %v374, %v364
    %v385 = vmul.f32 %v374, %v365
    %v386 = vmul.f32 %v374, %v366
    %v387 = vmul.f32 %v374, %v367
    %v388 = vmul.f32 %v374, %v368
    %v389 = vmul.f32 %v374, %v369
    %v390 = vmul.f32 %v374, %v370
    %v391 = vadd.f32 %v339, %v375
    %v392 = vadd.f32 %v340, %v376
    %v393 = vadd.f32 %v341, %v377
    %v394 = vadd.f32 %v342, %v378
    %v395 = vadd.f32 %v343, %v379
    %v396 = vadd.f32 %v344, %v380
    %v397 = vadd.f32 %v345, %v381
    %v398 = vadd.f32 %v346, %v382
    %v399 = vadd.f32 %v347, %v383
    %v400 = vadd.f32 %v348, %v384
    %v401 = vadd.f32 %v349, %v385
    %v402 = vadd.f32 %v350, %v386
    %v403 = vadd.f32 %v351, %v387
    %v404 = vadd.f32 %v352, %v388
    %v405 = vadd.f32 %v353, %v389
    %v406 = vadd.f32 %v354, %v390
    %407 = vst [vmem:[#allocation2] sm:$0xff] %v391
    %408 = vst [vmem:[#allocation2 + $0x8] sm:$0xff] %v392
    %409 = vst [vmem:[#allocation2 + $0x10] sm:$0xff] %v393
    %410 = vst [vmem:[#allocation2 + $0x18] sm:$0xff] %v394
    %411 = vst [vmem:[#allocation2 + $0x20] sm:$0xff] %v395
    %412 = vst [vmem:[#allocation2 + $0x28] sm:$0xff] %v396
    %413 = vst [vmem:[#allocation2 + $0x30] sm:$0xff] %v397
    %414 = vst [vmem:[#allocation2 + $0x38] sm:$0xff] %v398
    %415 = vst [vmem:[#allocation2 + $0x40] sm:$0xff] %v399
    %416 = vst [vmem:[#allocation2 + $0x48] sm:$0xff] %v400
    %417 = vst [vmem:[#allocation2 + $0x50] sm:$0xff] %v401
    %418 = vst [vmem:[#allocation2 + $0x58] sm:$0xff] %v402
    %419 = vst [vmem:[#allocation2 + $0x60] sm:$0xff] %v403
    %420 = vst [vmem:[#allocation2 + $0x68] sm:$0xff] %v404
    %421 = vst [vmem:[#allocation2 + $0x70] sm:$0xff] %v405
    %422 = vst [vmem:[#allocation2 + $0x78] sm:$0xff] %v406
    // Predicated region
    $region18: #{tpu_custom_call.1} parent=1 // pred_check
      _
    $region19: #{tpu_custom_call.1} parent=1 // pred_check_branch
      %424 = sbr.rel (0) target = $region21
    $region20: #{tpu_custom_call.1} parent=1 // pred_region
      %s426 = ssub.s32 2048, 2048
      %427 = vsyncadd [#allocation3], %s426
      %s428 = sshll.u32 [#allocation2], 4
      %s429 = int_to_ptr.vmem [resolvable:$true] %s428
      %434 = dma.vmem_to_hbm [thread:$0]  %s429, 2048, %s4, [#allocation3], 128, 128, 8
    $region21: #{tpu_custom_call.1} parent=1 // pred_fallthru
      _
    // Predicated region
    $region22: #{tpu_custom_call.1} parent=1 // pred_check
      _
    $region23: #{tpu_custom_call.1} parent=1 // pred_check_branch
      %436 = sbr.rel (0) target = $region25
    $region24: #{tpu_custom_call.1} parent=1 // pred_region
      %437 = dma.done [#allocation3], 2048
    $region25: #{tpu_custom_call.1} parent=1 // pred_fallthru
      _
    %438 = vsyncpa [#allocation3], 1

</llo_original>
